<compile_context>
chip_gen: v5e
topology: v5e:2x2
jax: 0.10.0
libtpu: 0.0.40
codegen_flags: <defaults>
</compile_context>

<pallas_src>
import jax
import jax.numpy as jnp
from jax.experimental import pallas as pl
from jax.experimental.pallas import tpu as pltpu


# --------------------------------------------------------------------------
# kernels
# --------------------------------------------------------------------------
def _masked_l1_kernel(x_ref, t_ref, nm_ref, sum_ref, cnt_ref, acc_ref, cnt_acc_ref):
    """Grid = (batch_tiles, L_tiles); the L axis is the (innermost) reduction."""
    il = pl.program_id(1)

    @pl.when(il == 0)
    def _():
        acc_ref[...] = jnp.zeros_like(acc_ref)
        cnt_acc_ref[...] = jnp.zeros_like(cnt_acc_ref)

    x = x_ref[...].astype(jnp.float32)                      # (TB, C, TL)
    t = t_ref[...].astype(jnp.float32)                      # (TB, C, TL)
    nm = nm_ref[...].astype(jnp.float32)                    # (TB, 1, TL), 0/1
    # nm in {0,1}  =>  |x*nm - t*nm| == nm * |x - t|
    contrib = nm * jnp.abs(x - t)                           # (TB, C, TL), pure VPU
    # Reduce over the leading TB axis: plain vreg adds, no cross-lane XLU work.
    acc_ref[...] += jnp.sum(contrib, axis=0, keepdims=True)      # (1, C, TL)
    cnt_acc_ref[...] += jnp.sum(nm, axis=0, keepdims=True)       # (1, 1, TL)

    @pl.when(il == pl.num_programs(1) - 1)
    def _():
        sum_ref[...] = acc_ref[...]
        cnt_ref[...] = cnt_acc_ref[...]


def _plain_l1_kernel(x_ref, t_ref, sum_ref, acc_ref):
    """use_mask=False specialization: no mask stream at all."""
    il = pl.program_id(1)

    @pl.when(il == 0)
    def _():
        acc_ref[...] = jnp.zeros_like(acc_ref)

    x = x_ref[...].astype(jnp.float32)
    t = t_ref[...].astype(jnp.float32)
    acc_ref[...] += jnp.sum(jnp.abs(x - t), axis=0, keepdims=True)   # (1, C, TL)

    @pl.when(il == pl.num_programs(1) - 1)
    def _():
        sum_ref[...] = acc_ref[...]


# --------------------------------------------------------------------------
# tiling heuristics (generation-aware)
# --------------------------------------------------------------------------
_TL_CANDIDATES = (2048, 1024, 512, 256, 128)
_PAD_L_THRESHOLD = 512   # only pad L when it is large AND not a multiple of 128


def _round_up(x, m):
    return (x + m - 1) // m * m


def _vmem_capacity_bytes():
    try:
        info = pltpu.get_tpu_info()
        cap = getattr(info, "vmem_capacity_bytes", None)
        if cap:
            return int(cap)
    except Exception:
        pass
    return 64 << 20   # conservative (v7x-sized) default if the query fails


def _choose_tiles(Bs, C, Lp, in_itemsize, masked, budget, block_b, block_l):
    """Pick (TL, TB) so the whole pipeline footprint fits `budget` bytes."""
    c8 = _round_up(max(C, 1), 8)

    def fixed_bytes(TL):
        f = c8 * TL * 4            # (1, C, TL) f32 accumulator
        f += 2 * c8 * TL * 4       # sum output block (double-buffered)
        if masked:
            f += 8 * TL * 4        # (1, 1, TL) count accumulator
            f += 2 * 8 * TL * 4    # count output block
        return f

    def per_tb_bytes(TL):
        p = 2 * 2 * C * TL * in_itemsize     # x, t tiles, double-buffered
        if masked:
            p += 2 * 32 * TL                 # int8 (TB,1,TL) mask blocks (sublane pad)
        return p

    # ---- lane tile ----
    if block_l is not None:
        TL = block_l
    elif Lp % 128 == 0:
        cands = [t for t in _TL_CANDIDATES if Lp % t == 0]
        TL = cands[-1]
        for t in cands:                      # prefer the largest TL that fits with TB=1
            if fixed_bytes(t) + per_tb_bytes(t) <= budget:
                TL = t
                break
    else:
        TL = Lp                              # small / unpadded L: one full-L block

    # ---- batch tile ----
    if block_b is not None:
        TB = block_b
    else:
        cap = max(1, (budget - fixed_bytes(TL)) // max(1, per_tb_bytes(TL)))
        cap = min(cap, Bs)
        TB = 1
        for t in range(int(cap), 0, -1):
            if Bs % t == 0:
                TB = t
                break
        # v7x megacore: make sure the "parallel" batch axis has >= 2 tiles.
        if TB == Bs and Bs >= 2:
            for t in range(Bs // 2, 0, -1):
                if Bs % t == 0:
                    TB = t
                    break

    footprint = fixed_bytes(TL) + TB * per_tb_bytes(TL)
    return TL, TB, footprint


# --------------------------------------------------------------------------
# wrapper
# --------------------------------------------------------------------------
def masked_l1_loss(inputs, mask, targets, use_mask=True,
                   block_b=None, block_l=None):
    """inputs, targets: (Bs, C, L); mask: (Bs, L) bool (ignored if not use_mask)."""
    assert inputs.ndim == 3 and inputs.shape == targets.shape
    Bs, C, L = inputs.shape

    if use_mask:
        mask = jnp.asarray(mask, dtype=jnp.bool_)

    # --- pad large ragged L to a multiple of 128 (lane-dense, bounded tiles) ---
    Lp = L
    if L % 128 != 0 and L > _PAD_L_THRESHOLD:
        Lp = _round_up(L, 128)
        pad = Lp - L
        inputs = jnp.pad(inputs, ((0, 0), (0, 0), (0, pad)))
        targets = jnp.pad(targets, ((0, 0), (0, 0), (0, pad)))
        if use_mask:
            mask = jnp.pad(mask, ((0, 0), (0, pad)), constant_values=True)

    vmem_cap = _vmem_capacity_bytes()
    budget = min(int(0.70 * vmem_cap), 100 << 20)   # ~45 MiB on v7x, ~90 MiB on v5e/v6e
    in_itemsize = jnp.dtype(inputs.dtype).itemsize

    TL, TB, footprint = _choose_tiles(Bs, C, Lp, in_itemsize, use_mask,
                                      budget, block_b, block_l)
    assert Lp % TL == 0 and (TL == Lp or TL % 128 == 0), "bad L tile"
    assert Bs % TB == 0, "bad batch tile"
    nb, nl = Bs // TB, Lp // TL

    vmem_limit = max(32 << 20, min(int(0.90 * vmem_cap), footprint + (16 << 20)))
    cparams = pltpu.CompilerParams(
        dimension_semantics=("parallel", "arbitrary"),   # batch tiles megacore-shardable
        vmem_limit_bytes=int(vmem_limit),
    )

    x_spec = pl.BlockSpec((TB, C, TL), lambda ib, il: (ib, 0, il))
    sum_spec = pl.BlockSpec((1, C, TL), lambda ib, il: (ib, 0, 0))
    sum_shape = jax.ShapeDtypeStruct((nb, C, TL), jnp.float32)

    if use_mask:
        # int8 not-mask keeps the mask stream at 1 byte/element of HBM traffic.
        # TODO(synk): feed the raw bool mask (skipping this cast) once bool refs
        # are guaranteed to lower on every target TPU generation.
        not_mask = jnp.logical_not(mask).astype(jnp.int8).reshape(Bs, 1, Lp)
        nm_spec = pl.BlockSpec((TB, 1, TL), lambda ib, il: (ib, 0, il))
        cnt_spec = pl.BlockSpec((1, 1, TL), lambda ib, il: (ib, 0, 0))
        cnt_shape = jax.ShapeDtypeStruct((nb, 1, TL), jnp.float32)

        sums, counts = pl.pallas_call(
            _masked_l1_kernel,
            out_shape=(sum_shape, cnt_shape),
            grid_spec=pltpu.PrefetchScalarGridSpec(
                num_scalar_prefetch=0,
                grid=(nb, nl),
                in_specs=[x_spec, x_spec, nm_spec],
                out_specs=(sum_spec, cnt_spec),
                scratch_shapes=[pltpu.VMEM((1, C, TL), jnp.float32),
                                pltpu.VMEM((1, 1, TL), jnp.float32)],
            ),
            compiler_params=cparams,
        )(inputs, targets, not_mask)
        # N = C * (#valid (b,l) positions), accumulated in f32 exactly like
        # torch's not_mask.sum(dtype=torch.float32).  All-True mask => N == 0
        # => Inf/NaN, matching the PyTorch reference.
        n_valid = jnp.float32(C) * jnp.sum(counts)
        return jnp.sum(sums) / n_valid

    # use_mask=False: F.l1_loss(inputs, targets) == mean(|x - t|)
    sums = pl.pallas_call(
        _plain_l1_kernel,
        out_shape=sum_shape,
        grid_spec=pltpu.PrefetchScalarGridSpec(
            num_scalar_prefetch=0,
            grid=(nb, nl),
            in_specs=[x_spec, x_spec],
            out_specs=sum_spec,
            scratch_shapes=[pltpu.VMEM((1, C, TL), jnp.float32)],
        ),
        compiler_params=cparams,
    )(inputs, targets)
    return jnp.sum(sums) / jnp.float32(Bs * C * L)


# --------------------------------------------------------------------------
# pure-JAX reference + test
# --------------------------------------------------------------------------
def _reference(inputs, mask, targets, use_mask=True):
    if not use_mask:
        return jnp.mean(jnp.abs(inputs - targets))
    Bs, C, L = inputs.shape
    nm = jnp.broadcast_to((~mask)[:, None, :].astype(jnp.float32), (Bs, C, L))
    N = jnp.sum(nm)
    return jnp.sum(jnp.abs(inputs * nm - targets * nm)) / N


if __name__ == "__main__":
    key = jax.random.PRNGKey(0)
    k1, k2, k3, k4, k5, k6, k7, k8, k9 = jax.random.split(key, 9)

    # --- small shape straight from the module's forward: (Bs, C, L) ---
    Bs, C, L = 2, 4, 16
    inputs = jax.random.normal(k1, (Bs, C, L), dtype=jnp.float32)
    targets = jax.random.normal(k2, (Bs, C, L), dtype=jnp.float32)
    mask = jax.random.bernoulli(k3, p=0.3, shape=(Bs, L))

    loss = jax.block_until_ready(masked_l1_loss(inputs, mask, targets, use_mask=True))
    ref = _reference(inputs, mask, targets, use_mask=True)
    assert jnp.allclose(loss, ref, rtol=1e-5, atol=1e-6), (loss, ref)

    loss_nm = jax.block_until_ready(masked_l1_loss(inputs, mask, targets, use_mask=False))
    ref_nm = _reference(inputs, mask, targets, use_mask=False)
    assert jnp.allclose(loss_nm, ref_nm, rtol=1e-5, atol=1e-6), (loss_nm, ref_nm)

    # --- exercise the tiled path (nb > 1, nl > 1) with explicit small blocks ---
    Bs2, C2, L2 = 4, 4, 256
    inputs2 = jax.random.normal(k4, (Bs2, C2, L2), dtype=jnp.float32)
    targets2 = jax.random.normal(k5, (Bs2, C2, L2), dtype=jnp.float32)
    mask2 = jax.random.bernoulli(k6, p=0.3, shape=(Bs2, L2))

    loss2 = jax.block_until_ready(
        masked_l1_loss(inputs2, mask2, targets2, use_mask=True, block_b=2, block_l=128)
    )
    ref2 = _reference(inputs2, mask2, targets2, use_mask=True)
    assert jnp.allclose(loss2, ref2, rtol=1e-5, atol=1e-6), (loss2, ref2)

    # --- exercise the L-padding path (large ragged L, non-multiple-of-128 C) ---
    Bs3, C3, L3 = 2, 3, 700
    inputs3 = jax.random.normal(k7, (Bs3, C3, L3), dtype=jnp.float32)
    targets3 = jax.random.normal(k8, (Bs3, C3, L3), dtype=jnp.float32)
    mask3 = jax.random.bernoulli(k9, p=0.3, shape=(Bs3, L3))

    loss3 = jax.block_until_ready(masked_l1_loss(inputs3, mask3, targets3, use_mask=True))
    ref3 = _reference(inputs3, mask3, targets3, use_mask=True)
    assert jnp.allclose(loss3, ref3, rtol=1e-5, atol=1e-6), (loss3, ref3)

    print("KERNEL_OK")
</pallas_src>

<mosaic_0001>
module attributes {stable_mosaic.version = 11 : i64} {
  func.func @_masked_l1_kernel(%arg0: i32, %arg1: i32, %arg2: memref<1x4x16xf32, #tpu.memory_space<vmem>>, %arg3: memref<1x4x16xf32, #tpu.memory_space<vmem>>, %arg4: memref<1x1x16xi8, #tpu.memory_space<vmem>>, %arg5: memref<1x4x16xf32, #tpu.memory_space<vmem>>, %arg6: memref<1x1x16xf32, #tpu.memory_space<vmem>>, %arg7: memref<1x4x16xf32, #tpu.memory_space<vmem>>, %arg8: memref<1x1x16xf32, #tpu.memory_space<vmem>>) attributes {dimension_semantics = [#tpu.dimension_semantics<parallel>, #tpu.dimension_semantics<arbitrary>], iteration_bounds = array<i64: 2, 1>, scalar_prefetch = 0 : i64, scratch_operands = 2 : i64, tpu.core_type = #tpu.core_type<tc>, window_params = [{transform_indices = @transform_0, window_bounds = array<i64: 1, 4, 16>}, {transform_indices = @transform_1, window_bounds = array<i64: 1, 4, 16>}, {transform_indices = @transform_2, window_bounds = array<i64: 1, 1, 16>}, {transform_indices = @transform_3, window_bounds = array<i64: 1, 4, 16>}, {transform_indices = @transform_4, window_bounds = array<i64: 1, 1, 16>}]} {
    %c0_i32 = arith.constant 0 : i32
    %0 = arith.cmpi eq, %arg1, %c0_i32 : i32
    %1 = arith.extui %0 : i1 to i32
    %c0_i32_0 = arith.constant 0 : i32
    %2 = arith.cmpi ne, %1, %c0_i32_0 : i32
    scf.if %2 {
      %cst_24 = arith.constant 0.000000e+00 : f32
      %24 = vector.broadcast %cst_24 : f32 to vector<1x4x16xf32>
      %c0_25 = arith.constant 0 : index
      %c0_26 = arith.constant 0 : index
      %c0_27 = arith.constant 0 : index
      %25 = vector.load %arg7[%c0_25, %c0_26, %c0_27] : memref<1x4x16xf32, #tpu.memory_space<vmem>>, vector<1x4x16xf32>
      tpu.vector_store %arg7[%c0_25, %c0_26, %c0_27], %24 {strides = array<i32>} : memref<1x4x16xf32, #tpu.memory_space<vmem>>, vector<1x4x16xf32>,
      %cst_28 = arith.constant 0.000000e+00 : f32
      %26 = vector.broadcast %cst_28 : f32 to vector<1x1x16xf32>
      %c0_29 = arith.constant 0 : index
      %c0_30 = arith.constant 0 : index
      %c0_31 = arith.constant 0 : index
      %27 = vector.load %arg8[%c0_29, %c0_30, %c0_31] : memref<1x1x16xf32, #tpu.memory_space<vmem>>, vector<1x1x16xf32>
      tpu.vector_store %arg8[%c0_29, %c0_30, %c0_31], %26 {strides = array<i32>} : memref<1x1x16xf32, #tpu.memory_space<vmem>>, vector<1x1x16xf32>,
    } else {
    }
    %c0 = arith.constant 0 : index
    %c0_1 = arith.constant 0 : index
    %c0_2 = arith.constant 0 : index
    %3 = vector.load %arg2[%c0, %c0_1, %c0_2] : memref<1x4x16xf32, #tpu.memory_space<vmem>>, vector<1x4x16xf32>
    %c0_3 = arith.constant 0 : index
    %c0_4 = arith.constant 0 : index
    %c0_5 = arith.constant 0 : index
    %4 = vector.load %arg3[%c0_3, %c0_4, %c0_5] : memref<1x4x16xf32, #tpu.memory_space<vmem>>, vector<1x4x16xf32>
    %c0_6 = arith.constant 0 : index
    %c0_7 = arith.constant 0 : index
    %c0_8 = arith.constant 0 : index
    %5 = vector.load %arg4[%c0_6, %c0_7, %c0_8] : memref<1x1x16xi8, #tpu.memory_space<vmem>>, vector<1x1x16xi8>
    %6 = arith.sitofp %5 : vector<1x1x16xi8> to vector<1x1x16xf32>
    %7 = arith.subf %3, %4 : vector<1x4x16xf32>
    %8 = math.absf %7 : vector<1x4x16xf32>
    %9 = vector.broadcast %6 : vector<1x1x16xf32> to vector<1x4x16xf32>
    %10 = arith.mulf %9, %8 : vector<1x4x16xf32>
    %c0_9 = arith.constant 0 : index
    %c0_10 = arith.constant 0 : index
    %c0_11 = arith.constant 0 : index
    %11 = vector.load %arg7[%c0_9, %c0_10, %c0_11] : memref<1x4x16xf32, #tpu.memory_space<vmem>>, vector<1x4x16xf32>
    %cst = arith.constant dense<0.000000e+00> : vector<4x16xf32>
    %12 = vector.multi_reduction <add>, %10, %cst [0] : vector<1x4x16xf32> to vector<4x16xf32>
    %13 = vector.shape_cast %12 : vector<4x16xf32> to vector<1x4x16xf32>
    %14 = arith.addf %11, %13 : vector<1x4x16xf32>
    %c0_12 = arith.constant 0 : index
    %c0_13 = arith.constant 0 : index
    %c0_14 = arith.constant 0 : index
    %15 = vector.load %arg7[%c0_12, %c0_13, %c0_14] : memref<1x4x16xf32, #tpu.memory_space<vmem>>, vector<1x4x16xf32>
    tpu.vector_store %arg7[%c0_12, %c0_13, %c0_14], %14 {strides = array<i32>} : memref<1x4x16xf32, #tpu.memory_space<vmem>>, vector<1x4x16xf32>,
    %c0_15 = arith.constant 0 : index
    %c0_16 = arith.constant 0 : index
    %c0_17 = arith.constant 0 : index
    %16 = vector.load %arg8[%c0_15, %c0_16, %c0_17] : memref<1x1x16xf32, #tpu.memory_space<vmem>>, vector<1x1x16xf32>
    %cst_18 = arith.constant dense<0.000000e+00> : vector<1x16xf32>
    %17 = vector.multi_reduction <add>, %6, %cst_18 [0] : vector<1x1x16xf32> to vector<1x16xf32>
    %18 = vector.shape_cast %17 : vector<1x16xf32> to vector<1x1x16xf32>
    %19 = arith.addf %16, %18 : vector<1x1x16xf32>
    %c0_19 = arith.constant 0 : index
    %c0_20 = arith.constant 0 : index
    %c0_21 = arith.constant 0 : index
    %20 = vector.load %arg8[%c0_19, %c0_20, %c0_21] : memref<1x1x16xf32, #tpu.memory_space<vmem>>, vector<1x1x16xf32>
    tpu.vector_store %arg8[%c0_19, %c0_20, %c0_21], %19 {strides = array<i32>} : memref<1x1x16xf32, #tpu.memory_space<vmem>>, vector<1x1x16xf32>,
    %c0_i32_22 = arith.constant 0 : i32
    %21 = arith.cmpi eq, %arg1, %c0_i32_22 : i32
    %22 = arith.extui %21 : i1 to i32
    %c0_i32_23 = arith.constant 0 : i32
    %23 = arith.cmpi ne, %22, %c0_i32_23 : i32
    scf.if %23 {
      %c0_24 = arith.constant 0 : index
      %c0_25 = arith.constant 0 : index
      %c0_26 = arith.constant 0 : index
      %24 = vector.load %arg7[%c0_24, %c0_25, %c0_26] : memref<1x4x16xf32, #tpu.memory_space<vmem>>, vector<1x4x16xf32>
      %c0_27 = arith.constant 0 : index
      %c0_28 = arith.constant 0 : index
      %c0_29 = arith.constant 0 : index
      %25 = vector.load %arg5[%c0_27, %c0_28, %c0_29] : memref<1x4x16xf32, #tpu.memory_space<vmem>>, vector<1x4x16xf32>
      tpu.vector_store %arg5[%c0_27, %c0_28, %c0_29], %24 {strides = array<i32>} : memref<1x4x16xf32, #tpu.memory_space<vmem>>, vector<1x4x16xf32>,
      %c0_30 = arith.constant 0 : index
      %c0_31 = arith.constant 0 : index
      %c0_32 = arith.constant 0 : index
      %26 = vector.load %arg8[%c0_30, %c0_31, %c0_32] : memref<1x1x16xf32, #tpu.memory_space<vmem>>, vector<1x1x16xf32>
      %c0_33 = arith.constant 0 : index
      %c0_34 = arith.constant 0 : index
      %c0_35 = arith.constant 0 : index
      %27 = vector.load %arg6[%c0_33, %c0_34, %c0_35] : memref<1x1x16xf32, #tpu.memory_space<vmem>>, vector<1x1x16xf32>
      tpu.vector_store %arg6[%c0_33, %c0_34, %c0_35], %26 {strides = array<i32>} : memref<1x1x16xf32, #tpu.memory_space<vmem>>, vector<1x1x16xf32>,
    } else {
    }
    return
  }
  func.func @transform_0(%arg0: i32, %arg1: i32) -> (i32, i32, i32) {
    %c0_i32 = arith.constant 0 : i32
    %c0_i32_0 = arith.constant 0 : i32
    return %arg0, %c0_i32, %arg1 : i32, i32, i32
  }
  func.func @transform_1(%arg0: i32, %arg1: i32) -> (i32, i32, i32) {
    %c0_i32 = arith.constant 0 : i32
    %c0_i32_0 = arith.constant 0 : i32
    return %arg0, %c0_i32, %arg1 : i32, i32, i32
  }
  func.func @transform_2(%arg0: i32, %arg1: i32) -> (i32, i32, i32) {
    %c0_i32 = arith.constant 0 : i32
    %c0_i32_0 = arith.constant 0 : i32
    return %arg0, %c0_i32, %arg1 : i32, i32, i32
  }
  func.func @transform_3(%arg0: i32, %arg1: i32) -> (i32, i32, i32) {
    %c0_i32 = arith.constant 0 : i32
    %c0_i32_0 = arith.constant 0 : i32
    %c0_i32_1 = arith.constant 0 : i32
    return %arg0, %c0_i32, %c0_i32_0 : i32, i32, i32
  }
  func.func @transform_4(%arg0: i32, %arg1: i32) -> (i32, i32, i32) {
    %c0_i32 = arith.constant 0 : i32
    %c0_i32_0 = arith.constant 0 : i32
    %c0_i32_1 = arith.constant 0 : i32
    return %arg0, %c0_i32, %c0_i32_0 : i32, i32, i32
  }
}

</mosaic_0001>

<llo_original>
// kernel: tpu_custom_call.1
$region0: #{tpu_custom_call.1}
  #allocation0 [shape = 'u32[]', space=smem, size = 0x4, offset = 0x4, fixed_abs, tag = 'smem constant byte address 0x4 - core index']
  #allocation1 [shape = 'u32[72,128]{1,0:T(1,128)}', space=vmem, size = 0x9000, scoped, tag = 'internal scratch']
  #allocation2 [shape = 'f32[1,4,16]{2,1,0:T(4,128)}', space=vmem, size = 0x800, scoped, tag = 'scratch operand']
  #allocation3 [shape = 'f32[1,1,16]{2,1,0:T(1,128)}', space=vmem, size = 0x200, scoped, tag = 'scratch operand']
  %s0 = inlined_call_operand.hbm [shape: f32[2,4,16], index: 0, kind: input, shape index: {}]
  %s1 = inlined_call_operand.hbm [shape: f32[2,4,16], index: 1, kind: input, shape index: {}]
  %s2 = inlined_call_operand.vmem [shape: s8[2,1,16], index: 2, kind: input, shape index: {}]
  %s3 = inlined_call_operand.hbm [shape: f32[2,4,16], index: 3, kind: output, shape index: {0}]
  %s4 = inlined_call_operand.hbm [shape: f32[2,1,16], index: 4, kind: output, shape index: {1}]
  %5 = xla_tuple %s3, %s4
  %s6 = sld [smem:[#allocation0]]
  $region69: #{tpu_custom_call.1} parent=0
    _
  %s8 = ssub.s32 1, %s6
  %s9 = scalar_select 0, %s8, %s6
  $region1: #{tpu_custom_call.1} parent=0
    #allocation4 [shape = 'u8[4096]{0}', space=vmem, size = 0x1000, scoped, tag = 'input window, operand 0']
    #allocation5 [shape = 's32[2]{0}', space=sflag, size = 0x8, scoped, tag = 'scoped memory for tpu_custom_call.1']
    #allocation6 [shape = 's32[2]{0}', space=sflag, size = 0x8, scoped, tag = 'scoped memory for tpu_custom_call.1']
    #allocation7 [shape = 'u8[4096]{0}', space=vmem, size = 0x1000, scoped, tag = 'input window, operand 1']
    #allocation8 [shape = 's32[2]{0}', space=sflag, size = 0x8, scoped, tag = 'scoped memory for tpu_custom_call.1']
    #allocation9 [shape = 'u8[4096]{0}', space=vmem, size = 0x1000, scoped, tag = 'output window, operand 0']
    #allocation10 [shape = 'u8[1024]{0}', space=vmem, size = 0x400, scoped, tag = 'output window, operand 1']
    #allocation11 [shape = 's32[2]{0}', space=sflag, size = 0x8, scoped, tag = 'scoped memory for tpu_custom_call.1']
    %10 = vsyncpa [#allocation5], 0
    %s11 = scalar_lea.sflag [#allocation5], 1
    %12 = vsyncpa %s11, 0
    %13 = vsyncpa [#allocation8], 0
    %s14 = scalar_lea.sflag [#allocation8], 1
    %15 = vsyncpa %s14, 0
    %16 = vsyncpa [#allocation6], 0
    %s17 = scalar_lea.sflag [#allocation6], 1
    %18 = vsyncpa %s17, 0
    %19 = vsyncpa [#allocation11], 0
    %s20 = scalar_lea.sflag [#allocation11], 1
    %21 = vsyncpa %s20, 0
    loop: start=0, step=1, limit=4
    $region2: #{tpu_custom_call.1} parent=1 // loop_pre_header
      _
    $region3: #{tpu_custom_call.1} parent=1 // loop_header
      %s23 = sphi 0, %s27
      %p24 = scmp.ge.s32.totalorder %s23, 4
      %s30 = sphi 0, %s42
      %s31 = sphi 0, %s38
      %s32 = sphi 0, %s30
      %s33 = sphi 0, %s31
      %s34 = sphi 0, %s32
      %s35 = sphi 0, %s33
      %s47 = sphi 0, %s49
      %s50 = sphi 0, %s47
      %s51 = sphi 0, %s50
      %s67 = sphi 0, %s51
      %s75 = sphi 0, %s77
      %s78 = sphi 0, %s75
      %s79 = sphi 0, %s78
      %s95 = sphi 0, %s79
      %s103 = sphi 0, %s105
      %s106 = sphi 0, %s103
      %s107 = sphi 0, %s106
      %s123 = sphi 0, %s107
      %s129 = sphi 0, %s131
      %s132 = sphi 0, %s129
      %s133 = sphi 0, %s132
      %s149 = sphi 0, %s133
      %s155 = sphi 0, %s157
      %s158 = sphi 0, %s155
      %s159 = sphi 0, %s158
      %s175 = sphi 0, %s159
    $region4: #{tpu_custom_call.1} parent=1 // loop_header_branch
      %26 = sbr.rel (%p24) target = $region8
    $region5: #{tpu_custom_call.1} parent=1 // loop_body
      %s28 = ssub.s32 %s23, 1
      %s29 = ssub.s32 %s23, 2
      %s36 = sadd.s32 1, %s31
      %p37 = scmp.ge.s32.totalorder %s36, 1
      %s38 = scalar_select %p37, 0, %s36
      %s39 = sadd.s32 1, %s30
      %s40 = scalar_select %p37, %s39, %s30
      %p41 = scmp.ge.s32.totalorder %s40, 2
      %s42 = scalar_select %p41, 0, %s40
      %s43 = ssub.s32 %s30, %s42
      %s44 = ssub.s32 %s31, %s38
      %s45 = sor.u32 %s43, %s44
      %p46 = scmp.eq.s32.totalorder %s45, 0
      %s48 = sadd.s32 %s47, 1
      %s49 = scalar_select %p46, %s47, %s48
      %p52 = pneg %p46
      %p53 = scmp.eq.s32.totalorder %s23, 1
      %p54 = por %p52, %p53
      %p55 = scmp.ne.s32.totalorder %s47, %s50
      %p56 = scmp.eq.s32.totalorder %s23, 0
      %p57 = por %p55, %p56
      %p58 = scmp.ne.s32.totalorder %s47, %s50
      %p59 = scmp.eq.s32.totalorder %s28, 1
      %p60 = por %p58, %p59
      %p61 = scmp.ne.s32.totalorder %s50, %s51
      %p62 = scmp.eq.s32.totalorder %s28, 0
      %p63 = por %p61, %p62
      %p64 = scmp.ne.s32.totalorder %s50, %s51
      %p65 = scmp.eq.s32.totalorder %s29, 1
      %p66 = por %p64, %p65
      %p68 = scmp.ne.s32.totalorder %s51, %s67
      %p69 = scmp.eq.s32.totalorder %s29, 0
      %p70 = por %p68, %p69
      %s71 = ssub.s32 %s30, %s42
      %s72 = ssub.s32 %s31, %s38
      %s73 = sor.u32 %s71, %s72
      %p74 = scmp.eq.s32.totalorder %s73, 0
      %s76 = sadd.s32 %s75, 1
      %s77 = scalar_select %p74, %s75, %s76
      %p80 = pneg %p74
      %p81 = scmp.eq.s32.totalorder %s23, 1
      %p82 = por %p80, %p81
      %p83 = scmp.ne.s32.totalorder %s75, %s78
      %p84 = scmp.eq.s32.totalorder %s23, 0
      %p85 = por %p83, %p84
      %p86 = scmp.ne.s32.totalorder %s75, %s78
      %p87 = scmp.eq.s32.totalorder %s28, 1
      %p88 = por %p86, %p87
      %p89 = scmp.ne.s32.totalorder %s78, %s79
      %p90 = scmp.eq.s32.totalorder %s28, 0
      %p91 = por %p89, %p90
      %p92 = scmp.ne.s32.totalorder %s78, %s79
      %p93 = scmp.eq.s32.totalorder %s29, 1
      %p94 = por %p92, %p93
      %p96 = scmp.ne.s32.totalorder %s79, %s95
      %p97 = scmp.eq.s32.totalorder %s29, 0
      %p98 = por %p96, %p97
      %s99 = ssub.s32 %s30, %s42
      %s100 = ssub.s32 %s31, %s38
      %s101 = sor.u32 %s99, %s100
      %p102 = scmp.eq.s32.totalorder %s101, 0
      %s104 = sadd.s32 %s103, 1
      %s105 = scalar_select %p102, %s103, %s104
      %p108 = pneg %p102
      %p109 = scmp.eq.s32.totalorder %s23, 1
      %p110 = por %p108, %p109
      %p111 = scmp.ne.s32.totalorder %s103, %s106
      %p112 = scmp.eq.s32.totalorder %s23, 0
      %p113 = por %p111, %p112
      %p114 = scmp.ne.s32.totalorder %s103, %s106
      %p115 = scmp.eq.s32.totalorder %s28, 1
      %p116 = por %p114, %p115
      %p117 = scmp.ne.s32.totalorder %s106, %s107
      %p118 = scmp.eq.s32.totalorder %s28, 0
      %p119 = por %p117, %p118
      %p120 = scmp.ne.s32.totalorder %s106, %s107
      %p121 = scmp.eq.s32.totalorder %s29, 1
      %p122 = por %p120, %p121
      %p124 = scmp.ne.s32.totalorder %s107, %s123
      %p125 = scmp.eq.s32.totalorder %s29, 0
      %p126 = por %p124, %p125
      %s127 = ssub.s32 %s30, %s42
      %p128 = scmp.eq.s32.totalorder %s127, 0
      %s130 = sadd.s32 %s129, 1
      %s131 = scalar_select %p128, %s129, %s130
      %p134 = pneg %p128
      %p135 = scmp.eq.s32.totalorder %s23, 1
      %p136 = por %p134, %p135
      %p137 = scmp.ne.s32.totalorder %s129, %s132
      %p138 = scmp.eq.s32.totalorder %s23, 0
      %p139 = por %p137, %p138
      %p140 = scmp.ne.s32.totalorder %s129, %s132
      %p141 = scmp.eq.s32.totalorder %s28, 1
      %p142 = por %p140, %p141
      %p143 = scmp.ne.s32.totalorder %s132, %s133
      %p144 = scmp.eq.s32.totalorder %s28, 0
      %p145 = por %p143, %p144
      %p146 = scmp.ne.s32.totalorder %s132, %s133
      %p147 = scmp.eq.s32.totalorder %s29, 1
      %p148 = por %p146, %p147
      %p150 = scmp.ne.s32.totalorder %s133, %s149
      %p151 = scmp.eq.s32.totalorder %s29, 0
      %p152 = por %p150, %p151
      %s153 = ssub.s32 %s30, %s42
      %p154 = scmp.eq.s32.totalorder %s153, 0
      %s156 = sadd.s32 %s155, 1
      %s157 = scalar_select %p154, %s155, %s156
      %p160 = pneg %p154
      %p161 = scmp.eq.s32.totalorder %s23, 1
      %p162 = por %p160, %p161
      %p163 = scmp.ne.s32.totalorder %s155, %s158
      %p164 = scmp.eq.s32.totalorder %s23, 0
      %p165 = por %p163, %p164
      %p166 = scmp.ne.s32.totalorder %s155, %s158
      %p167 = scmp.eq.s32.totalorder %s28, 1
      %p168 = por %p166, %p167
      %p169 = scmp.ne.s32.totalorder %s158, %s159
      %p170 = scmp.eq.s32.totalorder %s28, 0
      %p171 = por %p169, %p170
      %p172 = scmp.ne.s32.totalorder %s158, %s159
      %p173 = scmp.eq.s32.totalorder %s29, 1
      %p174 = por %p172, %p173
      %p176 = scmp.ne.s32.totalorder %s159, %s175
      %p177 = scmp.eq.s32.totalorder %s29, 0
      %p178 = por %p176, %p177
      %p179 = scmp.le.s32.totalorder 1, %s23
      %p180 = scmp.lt.s32.totalorder %s23, 3
      %p181 = pnand %p179, %p180
      %p182 = pneg %p181
      // Predicated region
      $region9: #{tpu_custom_call.1} parent=5 // pred_check
        _
      $region10: #{tpu_custom_call.1} parent=5 // pred_check_branch
        %184 = sbr.rel (%p181) target = $region12
      $region11: #{tpu_custom_call.1} parent=5 // pred_region
        %s185 = ssub.s32 %s23, 1
      $region12: #{tpu_custom_call.1} parent=5 // pred_fallthru
        _
      %p186 = scmp.lt.s32.totalorder %s23, 2
      // Predicated region
      $region13: #{tpu_custom_call.1} parent=5 // pred_check
        %p187 = pneg %p186
      $region14: #{tpu_custom_call.1} parent=5 // pred_check_branch
        %189 = sbr.rel (%p187) target = $region16
      $region15: #{tpu_custom_call.1} parent=5 // pred_region
        // Predicated region
        $region17: #{tpu_custom_call.1} parent=15 // pred_check
          %p190 = pneg %p57
        $region18: #{tpu_custom_call.1} parent=15 // pred_check_branch
          %192 = sbr.rel (%p190) target = $region20
        $region19: #{tpu_custom_call.1} parent=15 // pred_region
          %s193 = sand.u32 %s47, 1
          %s194 = scalar_lea.sflag [#allocation5], %s193
          %s195 = sand.u32 %s47, 1
          %s196 = smul.addr %s195, 4
          %s197 = scalar_lea.vmem [#allocation4], %s196
          %199 = vsyncadd %s194, 0
          %s200 = sadd.s32 %s31, %s30
          %s201 = smul.addr %s200, 4
          %s202 = scalar_lea.hbm %s0, %s201
          %s204 = sshll.u32 %s202, 4
          %s205 = int_to_ptr.hbm [resolvable:$true] %s204
          %s206 = sshll.u32 %s197, 4
          %s207 = int_to_ptr.vmem [resolvable:$true] %s206
          %209 = dma.hbm_to_vmem [thread:$0]  %s205, 64, %s207, %s194
        $region20: #{tpu_custom_call.1} parent=15 // pred_fallthru
          _
        // Predicated region
        $region21: #{tpu_custom_call.1} parent=15 // pred_check
          %p210 = pneg %p85
        $region22: #{tpu_custom_call.1} parent=15 // pred_check_branch
          %212 = sbr.rel (%p210) target = $region24
        $region23: #{tpu_custom_call.1} parent=15 // pred_region
          %s213 = sand.u32 %s75, 1
          %s214 = scalar_lea.sflag [#allocation8], %s213
          %s215 = sand.u32 %s75, 1
          %s216 = smul.addr %s215, 4
          %s217 = scalar_lea.vmem [#allocation7], %s216
          %219 = vsyncadd %s214, 0
          %s220 = sadd.s32 %s31, %s30
          %s221 = smul.addr %s220, 4
          %s222 = scalar_lea.hbm %s1, %s221
          %s224 = sshll.u32 %s222, 4
          %s225 = int_to_ptr.hbm [resolvable:$true] %s224
          %s226 = sshll.u32 %s217, 4
          %s227 = int_to_ptr.vmem [resolvable:$true] %s226
          %229 = dma.hbm_to_vmem [thread:$0]  %s225, 64, %s227, %s214
        $region24: #{tpu_custom_call.1} parent=15 // pred_fallthru
          _
        // Predicated region
        $region25: #{tpu_custom_call.1} parent=15 // pred_check
          %p230 = pneg %p113
        $region26: #{tpu_custom_call.1} parent=15 // pred_check_branch
          %232 = sbr.rel (%p230) target = $region28
        $region27: #{tpu_custom_call.1} parent=15 // pred_region
          %p233 = scmp.lt.s32.totalorder %s30, 1
          %s234 = scalar_select %p233, %s30, 1
          %p235 = scmp.lt.s32.totalorder %s31, 0
          %s236 = scalar_select %p235, %s31, 0
          %s237 = sadd.s32 %s236, %s234
          %s238 = scalar_lea.vmem %s2, %s237
        $region28: #{tpu_custom_call.1} parent=15 // pred_fallthru
          _
      $region16: #{tpu_custom_call.1} parent=5 // pred_fallthru
        _
      %p239 = scmp.le.s32.totalorder 1, %s23
      %p240 = scmp.lt.s32.totalorder %s23, 3
      %p241 = pnand %p239, %p240
      %p242 = pneg %p241
      // Predicated region
      $region29: #{tpu_custom_call.1} parent=5 // pred_check
        _
      $region30: #{tpu_custom_call.1} parent=5 // pred_check_branch
        %244 = sbr.rel (%p241) target = $region32
      $region31: #{tpu_custom_call.1} parent=5 // pred_region
        %s245 = ssub.s32 %s23, 1
        %s246 = sand.u32 %s50, 1
        %s247 = scalar_lea.sflag [#allocation5], %s246
        %s248 = sand.u32 %s50, 1
        %s249 = smul.addr %s248, 4
        %s250 = scalar_lea.vmem [#allocation4], %s249
        // Predicated region
        $region33: #{tpu_custom_call.1} parent=31 // pred_check
          %p251 = pneg %p63
        $region34: #{tpu_custom_call.1} parent=31 // pred_check_branch
          %253 = sbr.rel (%p251) target = $region36
        $region35: #{tpu_custom_call.1} parent=31 // pred_region
          %255 = dma.done %s247, 64
        $region36: #{tpu_custom_call.1} parent=31 // pred_fallthru
          _
        %s256 = sand.u32 %s78, 1
        %s257 = scalar_lea.sflag [#allocation8], %s256
        %s258 = sand.u32 %s78, 1
        %s259 = smul.addr %s258, 4
        %s260 = scalar_lea.vmem [#allocation7], %s259
        // Predicated region
        $region37: #{tpu_custom_call.1} parent=31 // pred_check
          %p261 = pneg %p91
        $region38: #{tpu_custom_call.1} parent=31 // pred_check_branch
          %263 = sbr.rel (%p261) target = $region40
        $region39: #{tpu_custom_call.1} parent=31 // pred_region
          %265 = dma.done %s257, 64
        $region40: #{tpu_custom_call.1} parent=31 // pred_fallthru
          _
        %s266 = sand.u32 %s50, 1
        %s267 = scalar_lea.sflag [#allocation5], %s266
        %s268 = sand.u32 %s50, 1
        %s269 = smul.addr %s268, 4
        %s270 = scalar_lea.vmem [#allocation4], %s269
        %p271 = pneg %p63
        %p272 = pneg %p60
        %s273 = sand.u32 %s78, 1
        %s274 = scalar_lea.sflag [#allocation8], %s273
        %s275 = sand.u32 %s78, 1
        %s276 = smul.addr %s275, 4
        %s277 = scalar_lea.vmem [#allocation7], %s276
        %p278 = pneg %p91
        %p279 = pneg %p88
        %p280 = scmp.lt.s32.totalorder %s32, 1
        %s281 = scalar_select %p280, %s32, 1
        %p282 = scmp.lt.s32.totalorder %s33, 0
        %s283 = scalar_select %p282, %s33, 0
        %s284 = sadd.s32 %s283, %s281
        %s285 = scalar_lea.vmem %s2, %s284
        %p286 = pneg %p119
        %p287 = pneg %p116
        %p288 = pneg %p145
        %p289 = pneg %p142
        %s290 = sand.u32 %s132, 1
        %s291 = scalar_lea.sflag [#allocation6], %s290
        %s292 = sand.u32 %s132, 1
        %s293 = smul.addr %s292, 4
        %s294 = scalar_lea.vmem [#allocation9], %s293
        %p295 = pneg %p171
        %p296 = pneg %p168
        %s297 = sand.u32 %s158, 1
        %s298 = scalar_lea.sflag [#allocation11], %s297
        %s299 = sand.u32 %s158, 1
        %s300 = scalar_lea.vmem [#allocation10], %s299
        %p301 = scmp.lt.s32.totalorder %s32, 1
        %s302 = scalar_select %p301, %s32, 1
        %p303 = scmp.lt.s32.totalorder %s33, 0
        %s304 = scalar_select %p303, %s33, 0
        %s305 = sadd.s32 %s304, %s302
        %s306 = scalar_lea.vmem %s2, %s305
        %p307 = scmp.eq.s32.totalorder %s33, 0
        // Predicated region
        $region41: #{tpu_custom_call.1} parent=31 // pred_check
          %p308 = pneg %p307
        $region42: #{tpu_custom_call.1} parent=31 // pred_check_branch
          %310 = sbr.rel (%p308) target = $region44
        $region43: #{tpu_custom_call.1} parent=31 // pred_region
          %vm311 = vcmask 125952
          %312 = vst.msk [vmem:[#allocation2] sm:$0xf] %vm311, 0.0
          %vm313 = vcmask 122880
          %314 = vst.msk [vmem:[#allocation3] sm:$0x1] %vm313, 0.0
        $region44: #{tpu_custom_call.1} parent=31 // pred_fallthru
          _
        %v315 = vld [vmem:[%s250] sm:$0xf]
        %v316 = vld [vmem:[%s260] sm:$0xf]
        %v317 = vld [vmem:[%s306] sm:$0x1]
        %v318 = vunpack.c.0.s8 %v317
        %v319 = vcvt.s32.f32 %v318
        %v320 = vsub.f32 %v315, %v316
        %v321 = vand.u32 2147483647, %v320
        %v322 = vperm.slane %v319, 0
        %v323 = vmul.f32 %v322, %v321
        %v324 = vld [vmem:[#allocation2] sm:$0xf]
        %v325 = vadd.f32 %v323, 0.0
        %v326 = vadd.f32 %v324, %v325
        %vm327 = vcmask 125952
        %328 = vst.msk [vmem:[#allocation2] sm:$0xf] %vm327, %v326
        %v329 = vld [vmem:[#allocation3] sm:$0x1]
        %v330 = vadd.f32 %v319, 0.0
        %v331 = vadd.f32 %v329, %v330
        %vm332 = vcmask 122880
        %333 = vst.msk [vmem:[#allocation3] sm:$0x1] %vm332, %v331
        // Predicated region
        $region45: #{tpu_custom_call.1} parent=31 // pred_check
          %p334 = pneg %p307
        $region46: #{tpu_custom_call.1} parent=31 // pred_check_branch
          %336 = sbr.rel (%p334) target = $region48
        $region47: #{tpu_custom_call.1} parent=31 // pred_region
          %v337 = vld [vmem:[#allocation2] sm:$0xf]
          %338 = vst.msk [vmem:[%s294] sm:$0xf] %vm327, %v337
          %v339 = vld [vmem:[#allocation3] sm:$0x1]
          %340 = vst.msk [vmem:[%s300] sm:$0x1] %vm332, %v339
        $region48: #{tpu_custom_call.1} parent=31 // pred_fallthru
          _
        %s341 = sand.u32 %s132, 1
        %s342 = scalar_lea.sflag [#allocation6], %s341
        %s343 = sand.u32 %s132, 1
        %s344 = smul.addr %s343, 4
        %s345 = scalar_lea.vmem [#allocation9], %s344
        %s346 = sand.u32 %s158, 1
        %s347 = scalar_lea.sflag [#allocation11], %s346
        %s348 = sand.u32 %s158, 1
        %s349 = scalar_lea.vmem [#allocation10], %s348
        // Predicated region
        $region49: #{tpu_custom_call.1} parent=31 // pred_check
          %p350 = pneg %p142
        $region50: #{tpu_custom_call.1} parent=31 // pred_check_branch
          %352 = sbr.rel (%p350) target = $region52
        $region51: #{tpu_custom_call.1} parent=31 // pred_region
          %354 = vsyncadd %s342, 0
          %s355 = smul.addr %s32, 4
          %s356 = scalar_lea.hbm %s3, %s355
          %s358 = sshll.u32 %s345, 4
          %s359 = int_to_ptr.vmem [resolvable:$true] %s358
          %s360 = sshll.u32 %s356, 4
          %s361 = int_to_ptr.hbm [resolvable:$true] %s360
          %363 = dma.vmem_to_hbm [thread:$0]  %s359, 64, %s361, %s342
        $region52: #{tpu_custom_call.1} parent=31 // pred_fallthru
          _
        // Predicated region
        $region53: #{tpu_custom_call.1} parent=31 // pred_check
          %p364 = pneg %p168
        $region54: #{tpu_custom_call.1} parent=31 // pred_check_branch
          %366 = sbr.rel (%p364) target = $region56
        $region55: #{tpu_custom_call.1} parent=31 // pred_region
          %368 = vsyncadd %s347, 0
          %s369 = scalar_lea.hbm %s4, %s32
          %s371 = sshll.u32 %s349, 4
          %s372 = int_to_ptr.vmem [resolvable:$true] %s371
          %s373 = sshll.u32 %s369, 4
          %s374 = int_to_ptr.hbm [resolvable:$true] %s373
          %376 = dma.vmem_to_hbm [thread:$0]  %s372, 16, %s374, %s347
        $region56: #{tpu_custom_call.1} parent=31 // pred_fallthru
          _
      $region32: #{tpu_custom_call.1} parent=5 // pred_fallthru
        _
      %p377 = scmp.le.s32.totalorder 2, %s23
      // Predicated region
      $region57: #{tpu_custom_call.1} parent=5 // pred_check
        %p378 = pneg %p377
      $region58: #{tpu_custom_call.1} parent=5 // pred_check_branch
        %380 = sbr.rel (%p378) target = $region60
      $region59: #{tpu_custom_call.1} parent=5 // pred_region
        %s381 = ssub.s32 %s23, 2
        // Predicated region
        $region61: #{tpu_custom_call.1} parent=59 // pred_check
          %p382 = pneg %p148
        $region62: #{tpu_custom_call.1} parent=59 // pred_check_branch
          %384 = sbr.rel (%p382) target = $region64
        $region63: #{tpu_custom_call.1} parent=59 // pred_region
          %s385 = sand.u32 %s133, 1
          %s386 = scalar_lea.sflag [#allocation6], %s385
          %s387 = sand.u32 %s133, 1
          %s388 = smul.addr %s387, 4
          %s389 = scalar_lea.vmem [#allocation9], %s388
          %391 = dma.done %s386, 64
        $region64: #{tpu_custom_call.1} parent=59 // pred_fallthru
          _
        // Predicated region
        $region65: #{tpu_custom_call.1} parent=59 // pred_check
          %p392 = pneg %p174
        $region66: #{tpu_custom_call.1} parent=59 // pred_check_branch
          %394 = sbr.rel (%p392) target = $region68
        $region67: #{tpu_custom_call.1} parent=59 // pred_region
          %s395 = sand.u32 %s159, 1
          %s396 = scalar_lea.sflag [#allocation11], %s395
          %s397 = sand.u32 %s159, 1
          %s398 = scalar_lea.vmem [#allocation10], %s397
          %400 = dma.done %s396, 16
        $region68: #{tpu_custom_call.1} parent=59 // pred_fallthru
          _
      $region60: #{tpu_custom_call.1} parent=5 // pred_fallthru
        _
    $region6: #{tpu_custom_call.1} parent=1 // loop_footer
      %s27 = sadd.s32 1, %s23
    $region7: #{tpu_custom_call.1} parent=1 // loop_footer_branch
      %22 = sbr.rel target = $region3
    $region8: #{tpu_custom_call.1} parent=1 // loop_exit
      _
    %401 = vsyncpa [#allocation5], 1
    %s402 = scalar_lea.sflag [#allocation5], 1
    %403 = vsyncpa %s402, 1
    %404 = vsyncpa [#allocation8], 1
    %s405 = scalar_lea.sflag [#allocation8], 1
    %406 = vsyncpa %s405, 1
    %407 = vsyncpa [#allocation6], 1
    %s408 = scalar_lea.sflag [#allocation6], 1
    %409 = vsyncpa %s408, 1
    %410 = vsyncpa [#allocation11], 1
    %s411 = scalar_lea.sflag [#allocation11], 1
    %412 = vsyncpa %s411, 1

</llo_original>
